<compile_context>
chip_gen: v7x
topology: tpu7x:2x2x1
jax: 0.10.0
libtpu: 0.0.40
codegen_flags: <defaults>
</compile_context>

<pallas_src>
import numpy as np
import jax
import jax.numpy as jnp
from jax.experimental import pallas as pl
from jax.experimental.pallas import tpu as pltpu  # noqa: F401  (kept for future tuning)


def _align8(r):
    return ((r + 7) // 8) * 8


def make_policy_kernel(num_inputs, hidden, n_act, offsets):
    """Build the fused forward kernel with static sizes / slab row offsets."""
    a2 = n_act * n_act
    head_w = a2 + n_act + 1
    r_w1, r_w2, r_wh, r_b1, r_b2, r_bh, r_tril, r_diag = offsets

    def kernel(x_ref, u_ref, p_ref, out_ref):
        x = x_ref[...]

        # --- BatchNorm1d, training mode: biased batch stats, gamma=1, beta=0.
        # var = E[x^2] - E[x]^2 so both cross-sublane reductions issue
        # back-to-back (shorter dependency chain before the first matmul).
        mean = jnp.mean(x, axis=0, keepdims=True)
        mean_sq = jnp.mean(x * x, axis=0, keepdims=True)
        var = jnp.maximum(mean_sq - mean * mean, 0.0)
        xn = (x - mean) * jax.lax.rsqrt(var + 1e-5)

        # --- parameter slab: pure row (sublane) views, every piece at lane 0.
        w1 = p_ref[r_w1:r_w1 + num_inputs, 0:hidden]
        w2 = p_ref[r_w2:r_w2 + hidden, 0:hidden]
        wh = p_ref[r_wh:r_wh + hidden, 0:head_w]
        b1 = p_ref[r_b1:r_b1 + 1, 0:hidden]
        b2 = p_ref[r_b2:r_b2 + 1, 0:hidden]
        bh = p_ref[r_bh:r_bh + 1, 0:head_w]
        tril = p_ref[r_tril:r_tril + 1, 0:a2]
        diag = p_ref[r_diag:r_diag + 1, 0:a2]

        # --- hidden MLP: the only MXU work in the kernel (3 matmuls total).
        h1 = jnp.tanh(jnp.dot(xn, w1, preferred_element_type=jnp.float32) + b1)
        h2 = jnp.tanh(jnp.dot(h1, w2, preferred_element_type=jnp.float32) + b2)

        # --- fused heads, ordered [L_flat | mu | V]: hot operand at lane 0.
        head = jnp.dot(h2, wh, preferred_element_type=jnp.float32) + bh
        l_flat = head[:, 0:a2]                     # (B, A*A), row-major i*A+j
        mu = jnp.tanh(head[:, a2:a2 + n_act])      # (B, A)
        v = head[:, a2 + n_act:a2 + n_act + 1]     # (B, 1)

        # L*tril(-1) + exp(L)*diag, flattened; exp of the full matrix matches
        # the PyTorch reference (which also exps before masking).
        l_masked = l_flat * tril + jnp.exp(l_flat) * diag   # (B, A*A)

        # quad = (u-mu)^T L L^T (u-mu) = ||L^T (u-mu)||^2, computed entirely on
        # the VPU/XLU: z_j = sum_i d_i * L[i, j] via static lane slices of
        # l_masked and lane-broadcasts of d (no helper matmuls, no R/G consts).
        d = u_ref[...] - mu                                  # (B, A)
        z = d[:, 0:1] * l_masked[:, 0:n_act]
        for i in range(1, n_act):                            # unrolled at trace time
            z = z + d[:, i:i + 1] * l_masked[:, i * n_act:(i + 1) * n_act]
        quad = jnp.sum(z * z, axis=1, keepdims=True)         # (B, 1)
        q = -0.5 * quad + v

        # --- single packed store: lanes [0:A]=mu, [A]=Q, [A+1]=V.
        out_ref[...] = jnp.concatenate([mu, q, v], axis=1)

    return kernel


def pack_params(w1, b1, w2, b2, wv, bv, wmu, bmu, wl, bl):
    """Pack every static parameter into one (rows, width) f32 slab.

    Row layout (all starts 8-aligned, every piece at lane offset 0):
      w1 (I,H) | w2 (H,H) | w_head (H, A^2+A+1) with columns [L | mu | V] |
      b1 row | b2 row | b_head row | tril(-1) mask row | diag mask row.
    Returns (slab, row_offsets).
    """
    arrs = [np.asarray(a, np.float32) for a in
            (w1, b1, w2, b2, wv, bv, wmu, bmu, wl, bl)]
    w1, b1, w2, b2, wv, bv, wmu, bmu, wl, bl = arrs
    num_inputs, hidden = w1.shape
    n_act = wmu.shape[1]
    a2 = n_act * n_act
    head_w = a2 + n_act + 1
    width = max(hidden, head_w, a2)

    w_head = np.concatenate([wl, wmu, wv], axis=1)                       # (H, A^2+A+1)
    b_head = np.concatenate([bl.reshape(1, -1), bmu.reshape(1, -1),
                             bv.reshape(1, -1)], axis=1)                 # (1, A^2+A+1)
    tril = np.tril(np.ones((n_act, n_act), np.float32), k=-1).reshape(1, a2)
    diag = np.eye(n_act, dtype=np.float32).reshape(1, a2)

    pieces = [w1, w2, w_head, b1.reshape(1, -1), b2.reshape(1, -1), b_head,
              tril, diag]
    offsets = []
    r = 0
    for p in pieces:
        offsets.append(r)
        r = _align8(r + p.shape[0])
    slab = np.zeros((r, width), np.float32)
    for off, p in zip(offsets, pieces):
        slab[off:off + p.shape[0], 0:p.shape[1]] = p
    return jnp.asarray(slab), tuple(offsets)


def naf_policy_forward(x, u, slab, offsets, num_inputs, hidden, n_act):
    """Run the fused Policy forward; returns (mu, Q, V)."""
    batch = x.shape[0]
    a2 = n_act * n_act
    head_w = a2 + n_act + 1
    kernel = make_policy_kernel(num_inputs, hidden, n_act, offsets)

    flops = 2 * batch * (num_inputs * hidden + hidden * hidden + hidden * head_w)
    transcendentals = batch * (2 * hidden + a2 + n_act)   # tanh h1/h2/mu + exp(L)
    bytes_accessed = 4 * (int(x.size) + int(u.size) + int(slab.size)
                          + batch * (n_act + 2))

    # No grid / specs: whole arrays as single VMEM blocks (single grid point,
    # so there is no pipelining to gain and no per-step prologue/epilogue).
    packed = pl.pallas_call(
        kernel,
        out_shape=jax.ShapeDtypeStruct((batch, n_act + 2), jnp.float32),
        cost_estimate=pl.CostEstimate(flops=flops,
                                      transcendentals=transcendentals,
                                      bytes_accessed=bytes_accessed),
    )(x, u, slab)

    mu = packed[:, :n_act]
    q = packed[:, n_act:n_act + 1]
    v = packed[:, n_act + 1:n_act + 2]
    return mu, q, v


def _linear_init(key, fan_in, fan_out, scale=1.0):
    """PyTorch nn.Linear-style U(-1/sqrt(fan_in), 1/sqrt(fan_in)), optional 0.1 scale."""
    kw, kb = jax.random.split(key)
    bound = 1.0 / float(np.sqrt(fan_in))
    w = jax.random.uniform(kw, (fan_in, fan_out), jnp.float32, -bound, bound) * scale
    b = jax.random.uniform(kb, (1, fan_out), jnp.float32, -bound, bound) * scale
    return w, b


def _reference(x, u, w1, b1, w2, b2, wv, bv, wmu, bmu, wl, bl, n_act):
    """Pure-JAX replica of the PyTorch forward (for validation)."""
    mean = jnp.mean(x, axis=0, keepdims=True)
    var = jnp.mean(jnp.square(x - mean), axis=0, keepdims=True)
    xn = (x - mean) / jnp.sqrt(var + 1e-5)
    h1 = jnp.tanh(xn @ w1 + b1)
    h2 = jnp.tanh(h1 @ w2 + b2)
    v = h2 @ wv + bv
    mu = jnp.tanh(h2 @ wmu + bmu)
    l = (h2 @ wl + bl).reshape(-1, n_act, n_act)
    tril = jnp.tril(jnp.ones((n_act, n_act), jnp.float32), k=-1)
    diag = jnp.eye(n_act, dtype=jnp.float32)
    l = l * tril[None] + jnp.exp(l) * diag[None]
    p = jnp.einsum('bij,bkj->bik', l, l)
    d = u - mu
    quad = jnp.einsum('bi,bij,bj->b', d, p, d)[:, None]
    q = -0.5 * quad + v
    return mu, q, v


if __name__ == "__main__":
    batch, num_inputs, hidden_size, action_space = 8, 16, 32, 4

    key = jax.random.PRNGKey(0)
    keys = jax.random.split(key, 7)

    x = jax.random.normal(keys[0], (batch, num_inputs), jnp.float32)
    u = jax.random.normal(keys[1], (batch, action_space), jnp.float32)

    w1, b1 = _linear_init(keys[2], num_inputs, hidden_size)
    w2, b2 = _linear_init(keys[3], hidden_size, hidden_size)
    wv, bv = _linear_init(keys[4], hidden_size, 1, scale=0.1)
    wmu, bmu = _linear_init(keys[5], hidden_size, action_space, scale=0.1)
    wl, bl = _linear_init(keys[6], hidden_size, action_space * action_space, scale=0.1)

    # ---- pack every static parameter into one slab ----
    slab, offsets = pack_params(w1, b1, w2, b2, wv, bv, wmu, bmu, wl, bl)

    mu_k, q_k, v_k = naf_policy_forward(x, u, slab, offsets,
                                        num_inputs, hidden_size, action_space)
    jax.block_until_ready((mu_k, q_k, v_k))

    # ---- validate against a pure-JAX replica of the PyTorch forward ----
    mu_r, q_r, v_r = _reference(x, u, w1, b1, w2, b2, wv, bv, wmu, bmu, wl, bl,
                                action_space)
    np.testing.assert_allclose(np.asarray(mu_k), np.asarray(mu_r), rtol=1e-2, atol=1e-3)
    np.testing.assert_allclose(np.asarray(v_k), np.asarray(v_r), rtol=1e-2, atol=1e-3)
    np.testing.assert_allclose(np.asarray(q_k), np.asarray(q_r), rtol=1e-2, atol=1e-3)

    assert mu_k.shape == (batch, action_space)
    assert q_k.shape == (batch, 1)
    assert v_k.shape == (batch, 1)
    print("KERNEL_OK")
</pallas_src>

<mosaic_0001>
module attributes {stable_mosaic.version = 11 : i64} {
  func.func @kernel(%arg0: memref<8x16xf32, #tpu.memory_space<vmem>>, %arg1: memref<8x4xf32, #tpu.memory_space<vmem>>, %arg2: memref<120x32xf32, #tpu.memory_space<vmem>>, %arg3: memref<8x6xf32, #tpu.memory_space<vmem>>) attributes {dimension_semantics = [], scalar_prefetch = 0 : i64, scratch_operands = 0 : i64, tpu.core_type = #tpu.core_type<tc>} {
    %c0 = arith.constant 0 : index
    %c0_0 = arith.constant 0 : index
    %0 = vector.load %arg0[%c0, %c0_0] : memref<8x16xf32, #tpu.memory_space<vmem>>, vector<8x16xf32>
    %cst = arith.constant dense<0.000000e+00> : vector<16xf32>
    %1 = vector.multi_reduction <add>, %0, %cst [0] : vector<8x16xf32> to vector<16xf32>
    %2 = vector.shape_cast %1 : vector<16xf32> to vector<1x16xf32>
    %cst_1 = arith.constant 8.000000e+00 : f32
    %3 = vector.broadcast %cst_1 : f32 to vector<1x16xf32>
    %4 = arith.divf %2, %3 : vector<1x16xf32>
    %5 = arith.mulf %0, %0 : vector<8x16xf32>
    %cst_2 = arith.constant dense<0.000000e+00> : vector<16xf32>
    %6 = vector.multi_reduction <add>, %5, %cst_2 [0] : vector<8x16xf32> to vector<16xf32>
    %7 = vector.shape_cast %6 : vector<16xf32> to vector<1x16xf32>
    %cst_3 = arith.constant 8.000000e+00 : f32
    %8 = vector.broadcast %cst_3 : f32 to vector<1x16xf32>
    %9 = arith.divf %7, %8 : vector<1x16xf32>
    %10 = arith.mulf %4, %4 : vector<1x16xf32>
    %11 = arith.subf %9, %10 : vector<1x16xf32>
    %cst_4 = arith.constant 0.000000e+00 : f32
    %12 = vector.broadcast %cst_4 : f32 to vector<1x16xf32>
    %13 = arith.maximumf %11, %12 : vector<1x16xf32>
    %14 = vector.broadcast %4 : vector<1x16xf32> to vector<8x16xf32>
    %15 = arith.subf %0, %14 : vector<8x16xf32>
    %cst_5 = arith.constant 9.99999974E-6 : f32
    %16 = vector.broadcast %cst_5 : f32 to vector<1x16xf32>
    %17 = arith.addf %13, %16 : vector<1x16xf32>
    %18 = math.rsqrt %17 : vector<1x16xf32>
    %19 = vector.broadcast %18 : vector<1x16xf32> to vector<8x16xf32>
    %20 = arith.mulf %15, %19 : vector<8x16xf32>
    %c0_6 = arith.constant 0 : index
    %c0_7 = arith.constant 0 : index
    %21 = vector.load %arg2[%c0_6, %c0_7] : memref<120x32xf32, #tpu.memory_space<vmem>>, vector<16x32xf32>
    %c16 = arith.constant 16 : index
    %c0_8 = arith.constant 0 : index
    %22 = vector.load %arg2[%c16, %c0_8] : memref<120x32xf32, #tpu.memory_space<vmem>>, vector<32x32xf32>
    %c48 = arith.constant 48 : index
    %c0_9 = arith.constant 0 : index
    %23 = vector.load %arg2[%c48, %c0_9] : memref<120x32xf32, #tpu.memory_space<vmem>>, vector<32x21xf32>
    %c80 = arith.constant 80 : index
    %c0_10 = arith.constant 0 : index
    %24 = vector.load %arg2[%c80, %c0_10] : memref<120x32xf32, #tpu.memory_space<vmem>>, vector<1x32xf32>
    %c88 = arith.constant 88 : index
    %c0_11 = arith.constant 0 : index
    %25 = vector.load %arg2[%c88, %c0_11] : memref<120x32xf32, #tpu.memory_space<vmem>>, vector<1x32xf32>
    %c96 = arith.constant 96 : index
    %c0_12 = arith.constant 0 : index
    %26 = vector.load %arg2[%c96, %c0_12] : memref<120x32xf32, #tpu.memory_space<vmem>>, vector<1x21xf32>
    %c104 = arith.constant 104 : index
    %c0_13 = arith.constant 0 : index
    %27 = vector.load %arg2[%c104, %c0_13] : memref<120x32xf32, #tpu.memory_space<vmem>>, vector<1x16xf32>
    %c112 = arith.constant 112 : index
    %c0_14 = arith.constant 0 : index
    %28 = vector.load %arg2[%c112, %c0_14] : memref<120x32xf32, #tpu.memory_space<vmem>>, vector<1x16xf32>
    %cst_15 = arith.constant dense<0.000000e+00> : vector<8x32xf32>
    %29 = tpu.matmul %20, %21, %cst_15 {dimension_numbers = #tpu.dot_dimension_numbers<[1], [0], [0], [1], [0, 0, 1, 1], [], []>} : vector<8x16xf32>, vector<16x32xf32>, vector<8x32xf32> -> vector<8x32xf32>
    %30 = vector.broadcast %24 : vector<1x32xf32> to vector<8x32xf32>
    %31 = arith.addf %29, %30 : vector<8x32xf32>
    %32 = math.tanh %31 : vector<8x32xf32>
    %cst_16 = arith.constant dense<0.000000e+00> : vector<8x32xf32>
    %33 = tpu.matmul %32, %22, %cst_16 {dimension_numbers = #tpu.dot_dimension_numbers<[1], [0], [0], [1], [0, 0, 1, 1], [], []>} : vector<8x32xf32>, vector<32x32xf32>, vector<8x32xf32> -> vector<8x32xf32>
    %34 = vector.broadcast %25 : vector<1x32xf32> to vector<8x32xf32>
    %35 = arith.addf %33, %34 : vector<8x32xf32>
    %36 = math.tanh %35 : vector<8x32xf32>
    %cst_17 = arith.constant dense<0.000000e+00> : vector<8x21xf32>
    %37 = tpu.matmul %36, %23, %cst_17 {dimension_numbers = #tpu.dot_dimension_numbers<[1], [0], [0], [1], [0, 0, 1, 1], [], []>} : vector<8x32xf32>, vector<32x21xf32>, vector<8x21xf32> -> vector<8x21xf32>
    %38 = vector.broadcast %26 : vector<1x21xf32> to vector<8x21xf32>
    %39 = arith.addf %37, %38 : vector<8x21xf32>
    %40 = vector.extract_strided_slice %39 {offsets = [0, 0], sizes = [8, 16], strides = [1, 1]} : vector<8x21xf32> to vector<8x16xf32>
    %41 = vector.extract_strided_slice %39 {offsets = [0, 16], sizes = [8, 4], strides = [1, 1]} : vector<8x21xf32> to vector<8x4xf32>
    %42 = math.tanh %41 : vector<8x4xf32>
    %43 = vector.extract_strided_slice %39 {offsets = [0, 20], sizes = [8, 1], strides = [1, 1]} : vector<8x21xf32> to vector<8x1xf32>
    %44 = vector.broadcast %27 : vector<1x16xf32> to vector<8x16xf32>
    %45 = arith.mulf %40, %44 : vector<8x16xf32>
    %46 = math.exp %40 : vector<8x16xf32>
    %47 = vector.broadcast %28 : vector<1x16xf32> to vector<8x16xf32>
    %48 = arith.mulf %46, %47 : vector<8x16xf32>
    %49 = arith.addf %45, %48 : vector<8x16xf32>
    %c0_18 = arith.constant 0 : index
    %c0_19 = arith.constant 0 : index
    %50 = vector.load %arg1[%c0_18, %c0_19] : memref<8x4xf32, #tpu.memory_space<vmem>>, vector<8x4xf32>
    %51 = arith.subf %50, %42 : vector<8x4xf32>
    %52 = vector.extract_strided_slice %51 {offsets = [0, 0], sizes = [8, 1], strides = [1, 1]} : vector<8x4xf32> to vector<8x1xf32>
    %53 = vector.extract_strided_slice %49 {offsets = [0, 0], sizes = [8, 4], strides = [1, 1]} : vector<8x16xf32> to vector<8x4xf32>
    %54 = vector.broadcast %52 : vector<8x1xf32> to vector<8x4xf32>
    %55 = arith.mulf %54, %53 : vector<8x4xf32>
    %56 = vector.extract_strided_slice %51 {offsets = [0, 1], sizes = [8, 1], strides = [1, 1]} : vector<8x4xf32> to vector<8x1xf32>
    %57 = vector.extract_strided_slice %49 {offsets = [0, 4], sizes = [8, 4], strides = [1, 1]} : vector<8x16xf32> to vector<8x4xf32>
    %58 = vector.broadcast %56 : vector<8x1xf32> to vector<8x4xf32>
    %59 = arith.mulf %58, %57 : vector<8x4xf32>
    %60 = arith.addf %55, %59 : vector<8x4xf32>
    %61 = vector.extract_strided_slice %51 {offsets = [0, 2], sizes = [8, 1], strides = [1, 1]} : vector<8x4xf32> to vector<8x1xf32>
    %62 = vector.extract_strided_slice %49 {offsets = [0, 8], sizes = [8, 4], strides = [1, 1]} : vector<8x16xf32> to vector<8x4xf32>
    %63 = vector.broadcast %61 : vector<8x1xf32> to vector<8x4xf32>
    %64 = arith.mulf %63, %62 : vector<8x4xf32>
    %65 = arith.addf %60, %64 : vector<8x4xf32>
    %66 = vector.extract_strided_slice %51 {offsets = [0, 3], sizes = [8, 1], strides = [1, 1]} : vector<8x4xf32> to vector<8x1xf32>
    %67 = vector.extract_strided_slice %49 {offsets = [0, 12], sizes = [8, 4], strides = [1, 1]} : vector<8x16xf32> to vector<8x4xf32>
    %68 = vector.broadcast %66 : vector<8x1xf32> to vector<8x4xf32>
    %69 = arith.mulf %68, %67 : vector<8x4xf32>
    %70 = arith.addf %65, %69 : vector<8x4xf32>
    %71 = arith.mulf %70, %70 : vector<8x4xf32>
    %cst_20 = arith.constant dense<0.000000e+00> : vector<8xf32>
    %72 = vector.multi_reduction <add>, %71, %cst_20 [1] : vector<8x4xf32> to vector<8xf32>
    %73 = vector.shape_cast %72 : vector<8xf32> to vector<8x1xf32>
    %cst_21 = arith.constant -5.000000e-01 : f32
    %74 = vector.broadcast %cst_21 : f32 to vector<8x1xf32>
    %75 = arith.mulf %74, %73 : vector<8x1xf32>
    %76 = arith.addf %75, %43 : vector<8x1xf32>
    %77 = tpu.concatenate %42, %76, %43 in 1 : vector<8x4xf32>, vector<8x1xf32>, vector<8x1xf32> -> vector<8x6xf32>
    %c0_22 = arith.constant 0 : index
    %c0_23 = arith.constant 0 : index
    %78 = vector.load %arg3[%c0_22, %c0_23] : memref<8x6xf32, #tpu.memory_space<vmem>>, vector<8x6xf32>
    tpu.vector_store %arg3[%c0_22, %c0_23], %77 {strides = array<i32>} : memref<8x6xf32, #tpu.memory_space<vmem>>, vector<8x6xf32>,
    return
  }
}

</mosaic_0001>

<llo_original>
// kernel: tpu_custom_call.1
$region0: #{tpu_custom_call.1}
  #allocation0 [shape = 'u32[]', space=smem, size = 0x4, offset = 0x4, fixed_abs, tag = 'smem constant byte address 0x4 - core index']
  #allocation1 [shape = 'u32[144,128]{1,0:T(1,128)}', space=vmem, size = 0x12000, scoped, tag = 'internal scratch']
  %s0 = inlined_call_operand.vmem [shape: f32[8,16], index: 0, kind: input, shape index: {}]
  %s1 = inlined_call_operand.vmem [shape: f32[8,4], index: 1, kind: input, shape index: {}]
  %s2 = inlined_call_operand.vmem [shape: f32[120,32], index: 2, kind: input, shape index: {}]
  %s3 = inlined_call_operand.hbm [shape: f32[8,6], index: 3, kind: output, shape index: {}]
  %s4 = sld [smem:[#allocation0]]
  $region22: #{tpu_custom_call.1} parent=0
    _
  %s6 = ssub.s32 1, %s4
  %s7 = scalar_select 0, %s6, %s4
  $region1: #{tpu_custom_call.1} parent=0
    #allocation2 [shape = 'u8[4096]{0}', space=vmem, size = 0x1000, scoped, tag = 'output window, operand 0, single buffered']
    #allocation3 [shape = 's32[1]{0}', space=sflag, size = 0x4, scoped, tag = 'scoped memory for tpu_custom_call.1']
    %8 = vsyncpa [#allocation3], 0
    // Predicated region
    $region2: #{tpu_custom_call.1} parent=1 // pred_check
      _
    $region3: #{tpu_custom_call.1} parent=1 // pred_check_branch
      %10 = sbr.rel (0) target = $region5
    $region4: #{tpu_custom_call.1} parent=1 // pred_region
      _
    $region5: #{tpu_custom_call.1} parent=1 // pred_fallthru
      _
    // Predicated region
    $region6: #{tpu_custom_call.1} parent=1 // pred_check
      _
    $region7: #{tpu_custom_call.1} parent=1 // pred_check_branch
      %12 = sbr.rel (0) target = $region9
    $region8: #{tpu_custom_call.1} parent=1 // pred_region
      _
    $region9: #{tpu_custom_call.1} parent=1 // pred_fallthru
      _
    // Predicated region
    $region10: #{tpu_custom_call.1} parent=1 // pred_check
      _
    $region11: #{tpu_custom_call.1} parent=1 // pred_check_branch
      %14 = sbr.rel (0) target = $region13
    $region12: #{tpu_custom_call.1} parent=1 // pred_region
      _
    $region13: #{tpu_custom_call.1} parent=1 // pred_fallthru
      _
    %v15 = vld [vmem:[%s0] sm:$0xff]
    %vm16 = vcmask 130048
    %v17 = vsel %vm16, %v15, 0.0
    %v18 = vrot.slane %v17, 4
    %v19 = vadd.f32 %v17, %v18
    %v20 = vrot.slane %v19, 2
    %v21 = vadd.f32 %v19, %v20
    %v22 = vrot.slane %v21, 1
    %v23 = vadd.f32 %v21, %v22
    %v24 = vrcp.pop 8.0
    %v25 = vmul.f32 %v23, %v24
    %v26 = vmul.f32 %v15, %v15
    %v27 = vsel %vm16, %v26, 0.0
    %v28 = vrot.slane %v27, 4
    %v29 = vadd.f32 %v27, %v28
    %v30 = vrot.slane %v29, 2
    %v31 = vadd.f32 %v29, %v30
    %v32 = vrot.slane %v31, 1
    %v33 = vadd.f32 %v31, %v32
    %v34 = vmul.f32 %v33, %v24
    %v35 = vmul.f32 %v25, %v25
    %v36 = vsub.f32 %v34, %v35
    %v37 = vmax.f32 %v36, 0.0
    %v38 = vsub.f32 %v15, %v25
    %v39 = vadd.f32 %v37, 1e-05
    %v40 = vrsqrt.pop %v39
    %v41 = vmul.f32 %v38, %v40
    %v42 = vld [vmem:[%s2] sm:$0xff]
    %v43 = vld [vmem:[%s2 + $0x8] sm:$0xff]
    %v44 = vld [vmem:[%s2 + $0x10] sm:$0xff]
    %v45 = vld [vmem:[%s2 + $0x18] sm:$0xff]
    %v46 = vld [vmem:[%s2 + $0x20] sm:$0xff]
    %v47 = vld [vmem:[%s2 + $0x28] sm:$0xff]
    %v48 = vld [vmem:[%s2 + $0x30] sm:$0xff]
    %v49 = vld [vmem:[%s2 + $0x38] sm:$0xff]
    %v50 = vld [vmem:[%s2 + $0x40] sm:$0xff]
    %v51 = vld [vmem:[%s2 + $0x48] sm:$0xff]
    %v52 = vld [vmem:[%s2 + $0x50] sm:$0x1]
    %v53 = vld [vmem:[%s2 + $0x58] sm:$0x1]
    %v54 = vld [vmem:[%s2 + $0x60] sm:$0x1]
    %v55 = vld [vmem:[%s2 + $0x68] sm:$0x1]
    %v56 = vld [vmem:[%s2 + $0x70] sm:$0x1]
    %v57 = vlaneseq
    %v58 = vshrl.u32 %v57, 7
    %v59 = vsub.s32 0, %v58
    %v60 = vrot.slane %v52, %v59
    %v62 = vsel %vm16, %v41, 0
    %64 = vmatprep.subr.mxu0 0.0
    %65 = vmatpush1.msra.mxu0 %v42
    %66 = vmatprep.subr.mxu0 0.0
    %67 = vmatpush1.msra.mxu0 %v43
    %68 = vmatprep.subr.mxu0 0.0
    %69 = vmatpush1.msra.mxu0 0.0
    %70 = vmatprep.subr.mxu0 0.0
    %71 = vmatpush1.msra.mxu0 0.0
    %72 = vmatprep.subr.mxu0 0.0
    %73 = vmatpush1.msra.mxu0 0.0
    %74 = vmatprep.subr.mxu0 0.0
    %75 = vmatpush1.msra.mxu0 0.0
    %76 = vmatprep.subr.mxu0 0.0
    %77 = vmatpush1.msra.mxu0 0.0
    %78 = vmatprep.subr.mxu0 0.0
    %79 = vmatpush1.msra.mxu0 0.0
    %80 = vmatprep.subr.mxu0 0.0
    %81 = vmatpush1.msra.mxu0 0.0
    %82 = vmatprep.subr.mxu0 0.0
    %83 = vmatpush1.msra.mxu0 0.0
    %84 = vmatprep.subr.mxu0 0.0
    %85 = vmatpush1.msra.mxu0 0.0
    %86 = vmatprep.subr.mxu0 0.0
    %87 = vmatpush1.msra.mxu0 0.0
    %88 = vmatprep.subr.mxu0 0.0
    %89 = vmatpush1.msra.mxu0 0.0
    %90 = vmatprep.subr.mxu0 0.0
    %91 = vmatpush1.msra.mxu0 0.0
    %92 = vmatprep.subr.mxu0 0.0
    %93 = vmatpush1.msra.mxu0 0.0
    %94 = vmatprep.subr.mxu0 0.0
    %95 = vmatpush1.msra.mxu0 0.0
    %96 = vmatprep.subr.mxu0 0.0
    %97 = vmatpush1.msra.mxu0 0.0
    %98 = vmatprep.subr.mxu0 0.0
    %99 = vmatpush1.msra.mxu0 0.0
    %100 = vmatprep.subr.mxu0 0.0
    %101 = vmatpush1.msra.mxu0 0.0
    %102 = vmatprep.subr.mxu0 0.0
    %103 = vmatpush1.msra.mxu0 0.0
    %104 = vmatprep.subr.mxu0 0.0
    %105 = vmatpush1.msra.mxu0 0.0
    %106 = vmatprep.subr.mxu0 0.0
    %107 = vmatpush1.msra.mxu0 0.0
    %108 = vmatprep.subr.mxu0 0.0
    %109 = vmatpush1.msra.mxu0 0.0
    %110 = vmatprep.subr.mxu0 0.0
    %111 = vmatpush1.msra.mxu0 0.0
    %112 = vmatprep.subr.mxu0 0.0
    %113 = vmatpush1.msra.mxu0 0.0
    %114 = vmatprep.subr.mxu0 0.0
    %115 = vmatpush1.msra.mxu0 0.0
    %116 = vmatprep.subr.mxu0 0.0
    %117 = vmatpush1.msra.mxu0 0.0
    %118 = vmatprep.subr.mxu0 0.0
    %119 = vmatpush1.msra.mxu0 0.0
    %120 = vmatprep.subr.mxu0 0.0
    %121 = vmatpush1.msra.mxu0 0.0
    %122 = vmatprep.subr.mxu0 0.0
    %123 = vmatpush1.msra.mxu0 0.0
    %124 = vmatprep.subr.mxu0 0.0
    %125 = vmatpush1.msra.mxu0 0.0
    %126 = vmatprep.subr.mxu0 0.0
    %127 = vmatpush1.msra.mxu0 0.0
    %128 = vmatprep.mubr.f32.mxu0 0.0
    %129 = vmatmul.mubr.f32.gmra.mrb[0].mxu0 %v62
    %v130 = vpop.f32.mrb[0].mxu0
    %v131 = vadd.f32 %v60, %v130
    %v132 = vpop.f32.mrb[0].mxu0
    %133 = vdwg.mxu0
    %v134 = vtanh.pop %v131
    %v135 = vlaneseq
    %v136 = vshrl.u32 %v135, 7
    %v137 = vsub.s32 0, %v136
    %v138 = vrot.slane %v53, %v137
    %vm139 = vcmask 261120
    %v141 = vsel %vm139, %v134, 0
    %143 = vmatprep.subr.mxu0 0.0
    %144 = vmatpush1.msra.mxu0 %v44
    %145 = vmatprep.subr.mxu0 0.0
    %146 = vmatpush1.msra.mxu0 %v45
    %147 = vmatprep.subr.mxu0 0.0
    %148 = vmatpush1.msra.mxu0 %v46
    %149 = vmatprep.subr.mxu0 0.0
    %150 = vmatpush1.msra.mxu0 %v47
    %151 = vmatprep.subr.mxu0 0.0
    %152 = vmatpush1.msra.mxu0 0.0
    %153 = vmatprep.subr.mxu0 0.0
    %154 = vmatpush1.msra.mxu0 0.0
    %155 = vmatprep.subr.mxu0 0.0
    %156 = vmatpush1.msra.mxu0 0.0
    %157 = vmatprep.subr.mxu0 0.0
    %158 = vmatpush1.msra.mxu0 0.0
    %159 = vmatprep.subr.mxu0 0.0
    %160 = vmatpush1.msra.mxu0 0.0
    %161 = vmatprep.subr.mxu0 0.0
    %162 = vmatpush1.msra.mxu0 0.0
    %163 = vmatprep.subr.mxu0 0.0
    %164 = vmatpush1.msra.mxu0 0.0
    %165 = vmatprep.subr.mxu0 0.0
    %166 = vmatpush1.msra.mxu0 0.0
    %167 = vmatprep.subr.mxu0 0.0
    %168 = vmatpush1.msra.mxu0 0.0
    %169 = vmatprep.subr.mxu0 0.0
    %170 = vmatpush1.msra.mxu0 0.0
    %171 = vmatprep.subr.mxu0 0.0
    %172 = vmatpush1.msra.mxu0 0.0
    %173 = vmatprep.subr.mxu0 0.0
    %174 = vmatpush1.msra.mxu0 0.0
    %175 = vmatprep.subr.mxu0 0.0
    %176 = vmatpush1.msra.mxu0 0.0
    %177 = vmatprep.subr.mxu0 0.0
    %178 = vmatpush1.msra.mxu0 0.0
    %179 = vmatprep.subr.mxu0 0.0
    %180 = vmatpush1.msra.mxu0 0.0
    %181 = vmatprep.subr.mxu0 0.0
    %182 = vmatpush1.msra.mxu0 0.0
    %183 = vmatprep.subr.mxu0 0.0
    %184 = vmatpush1.msra.mxu0 0.0
    %185 = vmatprep.subr.mxu0 0.0
    %186 = vmatpush1.msra.mxu0 0.0
    %187 = vmatprep.subr.mxu0 0.0
    %188 = vmatpush1.msra.mxu0 0.0
    %189 = vmatprep.subr.mxu0 0.0
    %190 = vmatpush1.msra.mxu0 0.0
    %191 = vmatprep.subr.mxu0 0.0
    %192 = vmatpush1.msra.mxu0 0.0
    %193 = vmatprep.subr.mxu0 0.0
    %194 = vmatpush1.msra.mxu0 0.0
    %195 = vmatprep.subr.mxu0 0.0
    %196 = vmatpush1.msra.mxu0 0.0
    %197 = vmatprep.subr.mxu0 0.0
    %198 = vmatpush1.msra.mxu0 0.0
    %199 = vmatprep.subr.mxu0 0.0
    %200 = vmatpush1.msra.mxu0 0.0
    %201 = vmatprep.subr.mxu0 0.0
    %202 = vmatpush1.msra.mxu0 0.0
    %203 = vmatprep.subr.mxu0 0.0
    %204 = vmatpush1.msra.mxu0 0.0
    %205 = vmatprep.subr.mxu0 0.0
    %206 = vmatpush1.msra.mxu0 0.0
    %207 = vmatprep.mubr.f32.mxu0 0.0
    %208 = vmatmul.mubr.f32.gmra.mrb[0].mxu0 %v141
    %v209 = vpop.f32.mrb[0].mxu0
    %v210 = vadd.f32 %v138, %v209
    %v211 = vpop.f32.mrb[0].mxu0
    %212 = vdwg.mxu0
    %v213 = vtanh.pop %v210
    %v214 = vlaneseq
    %v215 = vshrl.u32 %v214, 7
    %v216 = vsub.s32 0, %v215
    %v217 = vrot.slane %v54, %v216
    %v219 = vsel %vm139, %v213, 0
    %221 = vmatprep.subr.mxu0 0.0
    %222 = vmatpush1.msra.mxu0 %v48
    %223 = vmatprep.subr.mxu0 0.0
    %224 = vmatpush1.msra.mxu0 %v49
    %225 = vmatprep.subr.mxu0 0.0
    %226 = vmatpush1.msra.mxu0 %v50
    %227 = vmatprep.subr.mxu0 0.0
    %228 = vmatpush1.msra.mxu0 %v51
    %229 = vmatprep.subr.mxu0 0.0
    %230 = vmatpush1.msra.mxu0 0.0
    %231 = vmatprep.subr.mxu0 0.0
    %232 = vmatpush1.msra.mxu0 0.0
    %233 = vmatprep.subr.mxu0 0.0
    %234 = vmatpush1.msra.mxu0 0.0
    %235 = vmatprep.subr.mxu0 0.0
    %236 = vmatpush1.msra.mxu0 0.0
    %237 = vmatprep.subr.mxu0 0.0
    %238 = vmatpush1.msra.mxu0 0.0
    %239 = vmatprep.subr.mxu0 0.0
    %240 = vmatpush1.msra.mxu0 0.0
    %241 = vmatprep.subr.mxu0 0.0
    %242 = vmatpush1.msra.mxu0 0.0
    %243 = vmatprep.subr.mxu0 0.0
    %244 = vmatpush1.msra.mxu0 0.0
    %245 = vmatprep.subr.mxu0 0.0
    %246 = vmatpush1.msra.mxu0 0.0
    %247 = vmatprep.subr.mxu0 0.0
    %248 = vmatpush1.msra.mxu0 0.0
    %249 = vmatprep.subr.mxu0 0.0
    %250 = vmatpush1.msra.mxu0 0.0
    %251 = vmatprep.subr.mxu0 0.0
    %252 = vmatpush1.msra.mxu0 0.0
    %253 = vmatprep.subr.mxu0 0.0
    %254 = vmatpush1.msra.mxu0 0.0
    %255 = vmatprep.subr.mxu0 0.0
    %256 = vmatpush1.msra.mxu0 0.0
    %257 = vmatprep.subr.mxu0 0.0
    %258 = vmatpush1.msra.mxu0 0.0
    %259 = vmatprep.subr.mxu0 0.0
    %260 = vmatpush1.msra.mxu0 0.0
    %261 = vmatprep.subr.mxu0 0.0
    %262 = vmatpush1.msra.mxu0 0.0
    %263 = vmatprep.subr.mxu0 0.0
    %264 = vmatpush1.msra.mxu0 0.0
    %265 = vmatprep.subr.mxu0 0.0
    %266 = vmatpush1.msra.mxu0 0.0
    %267 = vmatprep.subr.mxu0 0.0
    %268 = vmatpush1.msra.mxu0 0.0
    %269 = vmatprep.subr.mxu0 0.0
    %270 = vmatpush1.msra.mxu0 0.0
    %271 = vmatprep.subr.mxu0 0.0
    %272 = vmatpush1.msra.mxu0 0.0
    %273 = vmatprep.subr.mxu0 0.0
    %274 = vmatpush1.msra.mxu0 0.0
    %275 = vmatprep.subr.mxu0 0.0
    %276 = vmatpush1.msra.mxu0 0.0
    %277 = vmatprep.subr.mxu0 0.0
    %278 = vmatpush1.msra.mxu0 0.0
    %279 = vmatprep.subr.mxu0 0.0
    %280 = vmatpush1.msra.mxu0 0.0
    %281 = vmatprep.subr.mxu0 0.0
    %282 = vmatpush1.msra.mxu0 0.0
    %283 = vmatprep.subr.mxu0 0.0
    %284 = vmatpush1.msra.mxu0 0.0
    %285 = vmatprep.mubr.f32.mxu0 0.0
    %286 = vmatmul.mubr.f32.gmra.mrb[0].mxu0 %v219
    %v287 = vpop.f32.mrb[0].mxu0
    %v288 = vadd.f32 %v217, %v287
    %v289 = vpop.f32.mrb[0].mxu0
    %290 = vdwg.mxu0
    %v291 = vtanh.pop %v288
    %v292 = vlaneseq
    %v293 = vshrl.u32 %v292, 7
    %v294 = vsub.s32 0, %v293
    %v295 = vrot.slane %v55, %v294
    %v296 = vmul.f32 %v288, %v295
    %v297 = vmul.f32 %v288, 1.442695
    %v298 = vpow.pop %v297
    %v299 = vlaneseq
    %v300 = vshrl.u32 %v299, 7
    %v301 = vsub.s32 0, %v300
    %v302 = vrot.slane %v56, %v301
    %v303 = vmul.f32 %v298, %v302
    %v304 = vadd.f32 %v296, %v303
    %v305 = vld [vmem:[%s1] sm:$0xff]
    %307 = vrot.lane.b32.xlu0 %v291, 112
    %v308 = vpop.permute.xlu0 %307
    %v310 = vsub.f32 %v305, %v308
    %312 = vset.pattern.permute.xlu0 0
    %313 = vperm.xlu0 %312, %v310
    %v314 = vpop.permute.xlu0 %313
    %v316 = vmul.f32 %v314, %v304
    %317 = vset.pattern.permute.xlu0 1
    %318 = vperm.xlu0 %317, %v310
    %v319 = vpop.permute.xlu0 %318
    %v321 = vmul.f32 %v319, %v304
    %323 = vrot.lane.b32.xlu0 %v321, 124
    %v324 = vpop.permute.xlu0 %323
    %v326 = vadd.f32 %v316, %v324
    %327 = vset.pattern.permute.xlu0 2
    %328 = vperm.xlu0 %327, %v310
    %v329 = vpop.permute.xlu0 %328
    %v331 = vmul.f32 %v329, %v304
    %333 = vrot.lane.b32.xlu0 %v331, 120
    %v334 = vpop.permute.xlu0 %333
    %v336 = vadd.f32 %v326, %v334
    %337 = vset.pattern.permute.xlu0 3
    %338 = vperm.xlu0 %337, %v310
    %v339 = vpop.permute.xlu0 %338
    %v341 = vmul.f32 %v339, %v304
    %343 = vrot.lane.b32.xlu0 %v341, 116
    %v344 = vpop.permute.xlu0 %343
    %v346 = vadd.f32 %v336, %v344
    %v347 = vmul.f32 %v346, %v346
    %vm348 = vcmask 31744
    %v349 = vsel %vm348, %v347, 0.0
    %350 = vadd.xlane.f32.xlu0 %v349
    %v351 = vpop.xlane.xlu0 %350
    %v352 = vmul.f32 %v351, -0.5
    %v353 = vadd.f32 %v352, %v288
    %355 = vrot.lane.b32.xlu0 %v353, 112
    %v356 = vpop.permute.xlu0 %355
    %359 = vrot.lane.b32.xlu0 %v288, 113
    %v360 = vpop.permute.xlu0 %359
    %v362 = vsel %vm348, %v308, %v356
    %vm363 = vcmask 39936
    %v364 = vsel %vm363, %v362, %v360
    %vm365 = vcmask 48128
    %366 = vst.msk [vmem:[#allocation2] sm:$0xff] %vm365, %v364
    // Predicated region
    $region14: #{tpu_custom_call.1} parent=1 // pred_check
      _
    $region15: #{tpu_custom_call.1} parent=1 // pred_check_branch
      %368 = sbr.rel (0) target = $region17
    $region16: #{tpu_custom_call.1} parent=1 // pred_region
      %s370 = ssub.s32 128, 128
      %371 = vsyncadd [#allocation3], %s370
      %s373 = sshll.u32 [#allocation2], 4
      %s374 = int_to_ptr.vmem [resolvable:$true] %s373
      %376 = dma.vmem_to_hbm [thread:$0]  %s374, 128, %s3, [#allocation3]
    $region17: #{tpu_custom_call.1} parent=1 // pred_fallthru
      _
    // Predicated region
    $region18: #{tpu_custom_call.1} parent=1 // pred_check
      _
    $region19: #{tpu_custom_call.1} parent=1 // pred_check_branch
      %378 = sbr.rel (0) target = $region21
    $region20: #{tpu_custom_call.1} parent=1 // pred_region
      %379 = dma.done [#allocation3], 128
    $region21: #{tpu_custom_call.1} parent=1 // pred_fallthru
      _
    %380 = vsyncpa [#allocation3], 1

</llo_original>
